<compile_context>
chip_gen: v5e
topology: v5e:2x2
jax: 0.10.0
libtpu: 0.0.40
codegen_flags: <defaults>
</compile_context>

<pallas_src>
import functools

import jax
import jax.numpy as jnp
from jax import lax
from jax.experimental import pallas as pl
from jax.experimental.pallas import tpu as pltpu


def _round_up(x, m):
    return (x + m - 1) // m * m


def _additive_intervention_kernel(fuse_ref, conf_ref, prob_ref, wq_ref, wk_ref,
                                  wt_ref, out_ref, scores_ref, *,
                                  n_valid, tile_n):
    n_pad = conf_ref.shape[0]
    n_blocks = n_pad // tile_n

    # query = fuse_rep @ Wq : bf16 MXU operands, f32 accumulation.   [tileB, H]
    query = jnp.dot(fuse_ref[...], wq_ref[...],
                    preferred_element_type=jnp.float32)

    wt_row = wt_ref[...]                  # [1, H] f32 (kept on f32 VPU path)

    def compute_scores_block(start):
        conf_blk = conf_ref[pl.ds(start, tile_n), :]              # [tileN, C] bf16
        # key block = conf_blk @ Wk                                 [tileN, H] f32
        key_blk = jnp.dot(conf_blk, wk_ref[...],
                          preferred_element_type=jnp.float32)
        # additive attention for this block, f32 on VPU/EUP.
        fused = jnp.tanh(query[:, None, :] + key_blk[None, :, :])  # [tileB,tileN,H]
        # w_t projection as VPU multiply + lane reduction (replaces the
        # width-1 [*,768]@[768,1] MXU matmul and deletes the reshapes).
        scores_blk = jnp.sum(fused * wt_row[None, :, :], axis=-1)  # [tileB,tileN]
        scores_ref[:, pl.ds(start, tile_n)] = scores_blk

    if n_blocks == 1:
        compute_scores_block(0)
    else:
        def body(nb, carry):
            compute_scores_block(pl.multiple_of(nb * tile_n, tile_n))
            return carry
        lax.fori_loop(0, n_blocks, body, 0)

    scores = scores_ref[...]                                       # [tileB, Npad]
    if n_valid < n_pad:
        # Padded confounder rows must not enter the softmax normalizer.
        col = lax.broadcasted_iota(jnp.int32, scores.shape, 1)
        scores = jnp.where(col < n_valid, scores, -jnp.inf)

    # softmax over the confounder axis (dim=1), numerically stable.
    m = jnp.max(scores, axis=1, keepdims=True)
    e = jnp.exp(scores - m)
    attn = e * pl.reciprocal(jnp.sum(e, axis=1, keepdims=True), approx=True)

    # fin = (attn * prob) @ confounder_set  (prior folded into the small [B,N] side)
    aw = (attn * prob_ref[...]).astype(conf_ref.dtype)             # [tileB, Npad]
    out_ref[...] = jnp.dot(aw, conf_ref[...],
                           preferred_element_type=jnp.float32)


def additive_intervention(confounder_set, fuse_rep, probabilities, wq, wk, wt,
                          *, tile_b=None, tile_n=None):
    """confounder_set:[N,C]  fuse_rep:[B,F]  probabilities:[N,1]
       wq:[F,768]=query.weight.T  wk:[C,768]=key.weight.T  wt:[768,1]=w_t.weight.T
       Returns fin:[B,C] float32."""
    n, c = confounder_set.shape
    b, f = fuse_rep.shape
    h = wq.shape[1]

    # Tile sizes: sublane-aligned; tileB*tileN*H*4 (the fused block) stays well
    # under v7x's 64 MiB VMEM even at 128x128.
    if tile_b is None:
        tile_b = min(128, _round_up(b, 8))
    if tile_n is None:
        tile_n = min(128, _round_up(n, 8))
    tile_b = _round_up(tile_b, 8)
    tile_n = _round_up(tile_n, 8)

    b_pad = _round_up(b, tile_b)
    n_pad = _round_up(n, tile_n)

    # bf16 MXU operands (halves HBM->VMEM bytes); accumulation stays f32 in-kernel.
    fuse_p = jnp.pad(fuse_rep, ((0, b_pad - b), (0, 0))).astype(jnp.bfloat16)
    conf_p = jnp.pad(confounder_set, ((0, n_pad - n), (0, 0))).astype(jnp.bfloat16)
    prob_p = jnp.pad(probabilities.reshape(1, n).astype(jnp.float32),
                     ((0, 0), (0, n_pad - n)))
    wq_b = wq.astype(jnp.bfloat16)
    wk_b = wk.astype(jnp.bfloat16)
    wt_row = wt.reshape(1, h).astype(jnp.float32)   # lane-dense, f32 (VPU path)

    kernel = functools.partial(_additive_intervention_kernel,
                               n_valid=n, tile_n=tile_n)

    grid = (b_pad // tile_b,)

    # Scoped-VMEM budget: double-buffered B-tiles + resident operands +
    # one fused block + scores scratch (+2x slack), never below default 32 MiB.
    vmem_bytes = (
        2 * (tile_b * f * 2 + tile_b * c * 4)          # fuse in / out (pipelined)
        + (n_pad * c + f * h + c * h) * 2              # bf16 residents
        + (n_pad + h) * 4                              # prob, w_t
        + tile_b * tile_n * h * 4                      # fused block (f32)
        + tile_b * n_pad * 4                           # scores scratch
    )
    vmem_limit = int(min(96 * 2 ** 20, max(2 * vmem_bytes, 32 * 2 ** 20)))

    out = pl.pallas_call(
        kernel,
        out_shape=jax.ShapeDtypeStruct((b_pad, c), jnp.float32),
        grid_spec=pltpu.PrefetchScalarGridSpec(
            num_scalar_prefetch=0,
            grid=grid,
            in_specs=[
                pl.BlockSpec((tile_b, f), lambda i: (i, 0)),   # fuse_rep (B-tiled)
                pl.BlockSpec((n_pad, c), lambda i: (0, 0)),    # confounders (resident)
                pl.BlockSpec((1, n_pad), lambda i: (0, 0)),    # probabilities
                pl.BlockSpec((f, h), lambda i: (0, 0)),        # Wq
                pl.BlockSpec((c, h), lambda i: (0, 0)),        # Wk
                pl.BlockSpec((1, h), lambda i: (0, 0)),        # w_t (row)
            ],
            out_specs=pl.BlockSpec((tile_b, c), lambda i: (i, 0)),
            scratch_shapes=[pltpu.VMEM((tile_b, n_pad), jnp.float32)],
        ),
        compiler_params=pltpu.CompilerParams(
            dimension_semantics=("parallel",),   # shard B-tiles across v7x cores
            vmem_limit_bytes=vmem_limit,
        ),
    )(fuse_p, conf_p, prob_p, wq_b, wk_b, wt_row)

    return out[:b]


def additive_intervention_ref(confounder_set, fuse_rep, probabilities, wq, wk, wt):
    """Pure-JAX f32 reference mirroring the PyTorch forward."""
    query = fuse_rep @ wq                                   # [B, H]
    key = confounder_set @ wk                               # [N, H]
    fused = jnp.tanh(query[:, None, :] + key[None, :, :])   # [B, N, H]
    attention = fused @ wt                                  # [B, N, 1]
    attention = jax.nn.softmax(attention, axis=1)
    fin = (attention * confounder_set[None] * probabilities[None]).sum(1)
    return fin


if __name__ == "__main__":
    # Small, TPU-friendly shapes consistent with the module.
    B = 2          # batch
    N = 8          # number of confounders
    CON = 128      # con_size
    FUSE = 128     # fuse_size
    H = 768        # hidden dim fixed by the module

    key0 = jax.random.PRNGKey(0)
    k1, k2, k3, k4, k5, k6 = jax.random.split(key0, 6)

    confounder_set = jax.random.normal(k1, (N, CON), dtype=jnp.float32)
    fuse_rep = jax.random.normal(k2, (B, FUSE), dtype=jnp.float32)
    probabilities = jax.nn.softmax(
        jax.random.normal(k3, (N, 1), dtype=jnp.float32), axis=0)

    # torch Linear-style uniform(-1/sqrt(in), 1/sqrt(in)), stored transposed.
    wq = jax.random.uniform(k4, (FUSE, H), jnp.float32,
                            -1.0 / FUSE ** 0.5, 1.0 / FUSE ** 0.5)
    wk = jax.random.uniform(k5, (CON, H), jnp.float32,
                            -1.0 / CON ** 0.5, 1.0 / CON ** 0.5)
    wt = jax.random.uniform(k6, (H, 1), jnp.float32,
                            -1.0 / H ** 0.5, 1.0 / H ** 0.5)

    out = additive_intervention(confounder_set, fuse_rep, probabilities, wq, wk, wt)
    out = jax.block_until_ready(out)

    ref = additive_intervention_ref(confounder_set, fuse_rep, probabilities, wq, wk, wt)
    assert out.shape == (B, CON)
    # bf16 MXU operands (f32 accumulation) -> relaxed tolerance vs f32 reference.
    assert jnp.allclose(out, ref, atol=2e-2, rtol=2e-2)

    print("KERNEL_OK")
</pallas_src>

<mosaic_0001>
module attributes {stable_mosaic.version = 11 : i64} {
  func.func @_additive_intervention_kernel(%arg0: i32, %arg1: memref<8x128xbf16, #tpu.memory_space<vmem>>, %arg2: memref<8x128xbf16, #tpu.memory_space<vmem>>, %arg3: memref<1x8xf32, #tpu.memory_space<vmem>>, %arg4: memref<128x768xbf16, #tpu.memory_space<vmem>>, %arg5: memref<128x768xbf16, #tpu.memory_space<vmem>>, %arg6: memref<1x768xf32, #tpu.memory_space<vmem>>, %arg7: memref<8x128xf32, #tpu.memory_space<vmem>>, %arg8: memref<8x8xf32, #tpu.memory_space<vmem>>) attributes {dimension_semantics = [#tpu.dimension_semantics<parallel>], iteration_bounds = array<i64: 1>, scalar_prefetch = 0 : i64, scratch_operands = 1 : i64, tpu.core_type = #tpu.core_type<tc>, window_params = [{transform_indices = @transform_0, window_bounds = array<i64: 8, 128>}, {pipeline_mode = #tpu.pipeline_mode<synchronous>, transform_indices = @transform_1, window_bounds = array<i64: 8, 128>}, {pipeline_mode = #tpu.pipeline_mode<synchronous>, transform_indices = @transform_2, window_bounds = array<i64: 1, 8>}, {pipeline_mode = #tpu.pipeline_mode<synchronous>, transform_indices = @transform_3, window_bounds = array<i64: 128, 768>}, {pipeline_mode = #tpu.pipeline_mode<synchronous>, transform_indices = @transform_4, window_bounds = array<i64: 128, 768>}, {pipeline_mode = #tpu.pipeline_mode<synchronous>, transform_indices = @transform_5, window_bounds = array<i64: 1, 768>}, {transform_indices = @transform_6, window_bounds = array<i64: 8, 128>}]} {
    %c0 = arith.constant 0 : index
    %c0_0 = arith.constant 0 : index
    %0 = vector.load %arg1[%c0, %c0_0] : memref<8x128xbf16, #tpu.memory_space<vmem>>, vector<8x128xbf16>
    %c0_1 = arith.constant 0 : index
    %c0_2 = arith.constant 0 : index
    %1 = vector.load %arg4[%c0_1, %c0_2] : memref<128x768xbf16, #tpu.memory_space<vmem>>, vector<128x768xbf16>
    %cst = arith.constant dense<0.000000e+00> : vector<8x768xf32>
    %2 = tpu.matmul %0, %1, %cst {dimension_numbers = #tpu.dot_dimension_numbers<[1], [0], [0], [1], [0, 0, 1, 1], [], []>} : vector<8x128xbf16>, vector<128x768xbf16>, vector<8x768xf32> -> vector<8x768xf32>
    %c0_3 = arith.constant 0 : index
    %c0_4 = arith.constant 0 : index
    %3 = vector.load %arg6[%c0_3, %c0_4] : memref<1x768xf32, #tpu.memory_space<vmem>>, vector<1x768xf32>
    %c0_5 = arith.constant 0 : index
    %c0_6 = arith.constant 0 : index
    %4 = vector.load %arg2[%c0_5, %c0_6] : memref<8x128xbf16, #tpu.memory_space<vmem>>, vector<8x128xbf16>
    %c0_7 = arith.constant 0 : index
    %c0_8 = arith.constant 0 : index
    %5 = vector.load %arg5[%c0_7, %c0_8] : memref<128x768xbf16, #tpu.memory_space<vmem>>, vector<128x768xbf16>
    %cst_9 = arith.constant dense<0.000000e+00> : vector<8x768xf32>
    %6 = tpu.matmul %4, %5, %cst_9 {dimension_numbers = #tpu.dot_dimension_numbers<[1], [0], [0], [1], [0, 0, 1, 1], [], []>} : vector<8x128xbf16>, vector<128x768xbf16>, vector<8x768xf32> -> vector<8x768xf32>
    %7 = vector.shape_cast %2 : vector<8x768xf32> to vector<8x1x768xf32>
    %8 = vector.shape_cast %6 : vector<8x768xf32> to vector<1x8x768xf32>
    %9 = vector.broadcast %7 : vector<8x1x768xf32> to vector<8x8x768xf32>
    %10 = vector.broadcast %8 : vector<1x8x768xf32> to vector<8x8x768xf32>
    %11 = arith.addf %9, %10 : vector<8x8x768xf32>
    %12 = math.tanh %11 : vector<8x8x768xf32>
    %13 = vector.shape_cast %3 : vector<1x768xf32> to vector<1x1x768xf32>
    %14 = vector.broadcast %13 : vector<1x1x768xf32> to vector<8x8x768xf32>
    %15 = arith.mulf %12, %14 : vector<8x8x768xf32>
    %cst_10 = arith.constant dense<0.000000e+00> : vector<8x8xf32>
    %16 = vector.multi_reduction <add>, %15, %cst_10 [2] : vector<8x8x768xf32> to vector<8x8xf32>
    %c0_11 = arith.constant 0 : index
    %c0_12 = arith.constant 0 : index
    %17 = vector.load %arg8[%c0_11, %c0_12] : memref<8x8xf32, #tpu.memory_space<vmem>>, vector<8x8xf32>
    tpu.vector_store %arg8[%c0_11, %c0_12], %16 {strides = array<i32>} : memref<8x8xf32, #tpu.memory_space<vmem>>, vector<8x8xf32>,
    %c0_13 = arith.constant 0 : index
    %c0_14 = arith.constant 0 : index
    %18 = vector.load %arg8[%c0_13, %c0_14] : memref<8x8xf32, #tpu.memory_space<vmem>>, vector<8x8xf32>
    %cst_15 = arith.constant dense<0xFF800000> : vector<8xf32>
    %19 = vector.multi_reduction <maximumf>, %18, %cst_15 [1] : vector<8x8xf32> to vector<8xf32>
    %20 = vector.shape_cast %19 : vector<8xf32> to vector<8x1xf32>
    %21 = vector.broadcast %20 : vector<8x1xf32> to vector<8x8xf32>
    %22 = arith.subf %18, %21 : vector<8x8xf32>
    %23 = math.exp %22 : vector<8x8xf32>
    %cst_16 = arith.constant dense<0.000000e+00> : vector<8xf32>
    %24 = vector.multi_reduction <add>, %23, %cst_16 [1] : vector<8x8xf32> to vector<8xf32>
    %25 = vector.shape_cast %24 : vector<8xf32> to vector<8x1xf32>
    %26 = tpu.reciprocal %25 {approx = true} : vector<8x1xf32> -> vector<8x1xf32>
    %27 = vector.broadcast %26 : vector<8x1xf32> to vector<8x8xf32>
    %28 = arith.mulf %23, %27 : vector<8x8xf32>
    %c0_17 = arith.constant 0 : index
    %c0_18 = arith.constant 0 : index
    %29 = vector.load %arg3[%c0_17, %c0_18] : memref<1x8xf32, #tpu.memory_space<vmem>>, vector<1x8xf32>
    %30 = vector.broadcast %29 : vector<1x8xf32> to vector<8x8xf32>
    %31 = arith.mulf %28, %30 : vector<8x8xf32>
    %32 = arith.truncf %31 : vector<8x8xf32> to vector<8x8xbf16>
    %c0_19 = arith.constant 0 : index
    %c0_20 = arith.constant 0 : index
    %33 = vector.load %arg2[%c0_19, %c0_20] : memref<8x128xbf16, #tpu.memory_space<vmem>>, vector<8x128xbf16>
    %cst_21 = arith.constant dense<0.000000e+00> : vector<8x128xf32>
    %34 = tpu.matmul %32, %33, %cst_21 {dimension_numbers = #tpu.dot_dimension_numbers<[1], [0], [0], [1], [0, 0, 1, 1], [], []>} : vector<8x8xbf16>, vector<8x128xbf16>, vector<8x128xf32> -> vector<8x128xf32>
    %c0_22 = arith.constant 0 : index
    %c0_23 = arith.constant 0 : index
    %35 = vector.load %arg7[%c0_22, %c0_23] : memref<8x128xf32, #tpu.memory_space<vmem>>, vector<8x128xf32>
    tpu.vector_store %arg7[%c0_22, %c0_23], %34 {strides = array<i32>} : memref<8x128xf32, #tpu.memory_space<vmem>>, vector<8x128xf32>,
    return
  }
  func.func @transform_0(%arg0: i32) -> (i32, i32) {
    %c0_i32 = arith.constant 0 : i32
    %c0_i32_0 = arith.constant 0 : i32
    return %arg0, %c0_i32 : i32, i32
  }
  func.func @transform_1(%arg0: i32) -> (i32, i32) {
    %c0_i32 = arith.constant 0 : i32
    %c0_i32_0 = arith.constant 0 : i32
    %c0_i32_1 = arith.constant 0 : i32
    return %c0_i32, %c0_i32_0 : i32, i32
  }
  func.func @transform_2(%arg0: i32) -> (i32, i32) {
    %c0_i32 = arith.constant 0 : i32
    %c0_i32_0 = arith.constant 0 : i32
    %c0_i32_1 = arith.constant 0 : i32
    return %c0_i32, %c0_i32_0 : i32, i32
  }
  func.func @transform_3(%arg0: i32) -> (i32, i32) {
    %c0_i32 = arith.constant 0 : i32
    %c0_i32_0 = arith.constant 0 : i32
    %c0_i32_1 = arith.constant 0 : i32
    return %c0_i32, %c0_i32_0 : i32, i32
  }
  func.func @transform_4(%arg0: i32) -> (i32, i32) {
    %c0_i32 = arith.constant 0 : i32
    %c0_i32_0 = arith.constant 0 : i32
    %c0_i32_1 = arith.constant 0 : i32
    return %c0_i32, %c0_i32_0 : i32, i32
  }
  func.func @transform_5(%arg0: i32) -> (i32, i32) {
    %c0_i32 = arith.constant 0 : i32
    %c0_i32_0 = arith.constant 0 : i32
    %c0_i32_1 = arith.constant 0 : i32
    return %c0_i32, %c0_i32_0 : i32, i32
  }
  func.func @transform_6(%arg0: i32) -> (i32, i32) {
    %c0_i32 = arith.constant 0 : i32
    %c0_i32_0 = arith.constant 0 : i32
    return %arg0, %c0_i32 : i32, i32
  }
}

</mosaic_0001>

<llo_original>
// kernel: tpu_custom_call.1
$region0: #{tpu_custom_call.1}
  #allocation0 [shape = 'u32[]', space=smem, size = 0x4, offset = 0x4, fixed_abs, tag = 'smem constant byte address 0x4 - core index']
  #allocation1 [shape = 'u32[72,128]{1,0:T(1,128)}', space=vmem, size = 0x9000, scoped, tag = 'internal scratch']
  #allocation2 [shape = 'f32[8,8]{1,0:T(8,128)}', space=vmem, size = 0x1000, scoped, tag = 'scratch operand']
  %s0 = inlined_call_operand.hbm [shape: bf16[8,128], index: 0, kind: input, shape index: {}]
  %s1 = inlined_call_operand.hbm [shape: bf16[8,128], index: 1, kind: input, shape index: {}]
  %s2 = inlined_call_operand.vmem [shape: f32[1,8], index: 2, kind: input, shape index: {}]
  %s3 = inlined_call_operand.hbm [shape: bf16[128,768], index: 3, kind: input, shape index: {}]
  %s4 = inlined_call_operand.hbm [shape: bf16[128,768], index: 4, kind: input, shape index: {}]
  %s5 = inlined_call_operand.hbm [shape: f32[1,768], index: 5, kind: input, shape index: {}]
  %s6 = inlined_call_operand.hbm [shape: f32[8,128], index: 6, kind: output, shape index: {}]
  %s7 = sld [smem:[#allocation0]]
  $region54: #{tpu_custom_call.1} parent=0
    _
  %s9 = ssub.s32 1, %s7
  %s10 = scalar_select 0, %s9, %s7
  $region1: #{tpu_custom_call.1} parent=0
    #allocation3 [shape = 'u8[2048]{0}', space=vmem, size = 0x800, scoped, tag = 'input window, operand 0, single buffered']
    #allocation4 [shape = 's32[1]{0}', space=sflag, size = 0x4, scoped, tag = 'scoped memory for tpu_custom_call.1']
    #allocation5 [shape = 's32[1]{0}', space=sflag, size = 0x4, scoped, tag = 'scoped memory for tpu_custom_call.1']
    #allocation6 [shape = 'u8[2048]{0}', space=vmem, size = 0x800, scoped, tag = 'input window, operand 1, single buffered']
    #allocation7 [shape = 's32[1]{0}', space=sflag, size = 0x4, scoped, tag = 'scoped memory for tpu_custom_call.1']
    #allocation8 [shape = 'u8[196608]{0}', space=vmem, size = 0x30000, scoped, tag = 'input window, operand 3, single buffered']
    #allocation9 [shape = 'u8[196608]{0}', space=vmem, size = 0x30000, scoped, tag = 'input window, operand 4, single buffered']
    #allocation10 [shape = 's32[1]{0}', space=sflag, size = 0x4, scoped, tag = 'scoped memory for tpu_custom_call.1']
    #allocation11 [shape = 'u8[3072]{0}', space=vmem, size = 0xc00, scoped, tag = 'input window, operand 5, single buffered']
    #allocation12 [shape = 'u8[4096]{0}', space=vmem, size = 0x1000, scoped, tag = 'output window, operand 0, single buffered']
    %11 = vsyncpa [#allocation4], 0
    %12 = vsyncpa [#allocation7], 0
    %13 = vsyncpa [#allocation10], 0
    %14 = vsyncpa [#allocation5], 0
    // Predicated region
    $region2: #{tpu_custom_call.1} parent=1 // pred_check
      _
    $region3: #{tpu_custom_call.1} parent=1 // pred_check_branch
      %16 = sbr.rel (0) target = $region5
    $region4: #{tpu_custom_call.1} parent=1 // pred_region
      %18 = vsyncadd [#allocation4], 0
      %s20 = sshll.u32 %s0, 4
      %s21 = int_to_ptr.hbm [resolvable:$true] %s20
      %s22 = sshll.u32 [#allocation3], 4
      %s23 = int_to_ptr.vmem [resolvable:$true] %s22
      %25 = dma.hbm_to_vmem [thread:$0]  %s21, 64, %s23, [#allocation4]
    $region5: #{tpu_custom_call.1} parent=1 // pred_fallthru
      _
    // Predicated region
    $region6: #{tpu_custom_call.1} parent=1 // pred_check
      _
    $region7: #{tpu_custom_call.1} parent=1 // pred_check_branch
      %27 = sbr.rel (0) target = $region9
    $region8: #{tpu_custom_call.1} parent=1 // pred_region
      %29 = vsyncadd [#allocation7], 0
      %s31 = sshll.u32 %s1, 4
      %s32 = int_to_ptr.hbm [resolvable:$true] %s31
      %s33 = sshll.u32 [#allocation6], 4
      %s34 = int_to_ptr.vmem [resolvable:$true] %s33
      %36 = dma.hbm_to_vmem [thread:$0]  %s32, 64, %s34, [#allocation7]
    $region9: #{tpu_custom_call.1} parent=1 // pred_fallthru
      _
    // Predicated region
    $region10: #{tpu_custom_call.1} parent=1 // pred_check
      _
    $region11: #{tpu_custom_call.1} parent=1 // pred_check_branch
      %38 = sbr.rel (0) target = $region13
    $region12: #{tpu_custom_call.1} parent=1 // pred_region
      _
    $region13: #{tpu_custom_call.1} parent=1 // pred_fallthru
      _
    // Predicated region
    $region14: #{tpu_custom_call.1} parent=1 // pred_check
      _
    $region15: #{tpu_custom_call.1} parent=1 // pred_check_branch
      %40 = sbr.rel (0) target = $region17
    $region16: #{tpu_custom_call.1} parent=1 // pred_region
      %42 = vsyncadd [#allocation7], 0
      %s43 = sshll.u32 %s3, 4
      %s44 = int_to_ptr.hbm [resolvable:$true] %s43
      %s45 = sshll.u32 [#allocation8], 4
      %s46 = int_to_ptr.vmem [resolvable:$true] %s45
      %51 = dma.hbm_to_vmem [thread:$0]  %s44, 6144, %s46, [#allocation7], 384, 384, 24
    $region17: #{tpu_custom_call.1} parent=1 // pred_fallthru
      _
    // Predicated region
    $region18: #{tpu_custom_call.1} parent=1 // pred_check
      _
    $region19: #{tpu_custom_call.1} parent=1 // pred_check_branch
      %53 = sbr.rel (0) target = $region21
    $region20: #{tpu_custom_call.1} parent=1 // pred_region
      %55 = vsyncadd [#allocation10], 0
      %s56 = sshll.u32 %s4, 4
      %s57 = int_to_ptr.hbm [resolvable:$true] %s56
      %s58 = sshll.u32 [#allocation9], 4
      %s59 = int_to_ptr.vmem [resolvable:$true] %s58
      %64 = dma.hbm_to_vmem [thread:$0]  %s57, 6144, %s59, [#allocation10], 384, 384, 24
    $region21: #{tpu_custom_call.1} parent=1 // pred_fallthru
      _
    // Predicated region
    $region22: #{tpu_custom_call.1} parent=1 // pred_check
      _
    $region23: #{tpu_custom_call.1} parent=1 // pred_check_branch
      %66 = sbr.rel (0) target = $region25
    $region24: #{tpu_custom_call.1} parent=1 // pred_region
      %68 = vsyncadd [#allocation10], 0
      %s70 = sshll.u32 %s5, 4
      %s71 = int_to_ptr.hbm [resolvable:$true] %s70
      %s72 = sshll.u32 [#allocation11], 4
      %s73 = int_to_ptr.vmem [resolvable:$true] %s72
      %75 = dma.hbm_to_vmem [thread:$0]  %s71, 96, %s73, [#allocation10]
    $region25: #{tpu_custom_call.1} parent=1 // pred_fallthru
      _
    // Predicated region
    $region26: #{tpu_custom_call.1} parent=1 // pred_check
      _
    $region27: #{tpu_custom_call.1} parent=1 // pred_check_branch
      %77 = sbr.rel (0) target = $region29
    $region28: #{tpu_custom_call.1} parent=1 // pred_region
      %79 = dma.done [#allocation4], 64
    $region29: #{tpu_custom_call.1} parent=1 // pred_fallthru
      _
    // Predicated region
    $region30: #{tpu_custom_call.1} parent=1 // pred_check
      _
    $region31: #{tpu_custom_call.1} parent=1 // pred_check_branch
      %81 = sbr.rel (0) target = $region33
    $region32: #{tpu_custom_call.1} parent=1 // pred_region
      %83 = dma.done [#allocation7], 64
    $region33: #{tpu_custom_call.1} parent=1 // pred_fallthru
      _
    // Predicated region
    $region34: #{tpu_custom_call.1} parent=1 // pred_check
      _
    $region35: #{tpu_custom_call.1} parent=1 // pred_check_branch
      %85 = sbr.rel (0) target = $region37
    $region36: #{tpu_custom_call.1} parent=1 // pred_region
      %87 = dma.done [#allocation7], 6144
    $region37: #{tpu_custom_call.1} parent=1 // pred_fallthru
      _
    // Predicated region
    $region38: #{tpu_custom_call.1} parent=1 // pred_check
      _
    $region39: #{tpu_custom_call.1} parent=1 // pred_check_branch
      %89 = sbr.rel (0) target = $region41
    $region40: #{tpu_custom_call.1} parent=1 // pred_region
      %91 = dma.done [#allocation10], 6144
    $region41: #{tpu_custom_call.1} parent=1 // pred_fallthru
      _
    // Predicated region
    $region42: #{tpu_custom_call.1} parent=1 // pred_check
      _
    $region43: #{tpu_custom_call.1} parent=1 // pred_check_branch
      %93 = sbr.rel (0) target = $region45
    $region44: #{tpu_custom_call.1} parent=1 // pred_region
      %95 = dma.done [#allocation10], 96
    $region45: #{tpu_custom_call.1} parent=1 // pred_fallthru
      _
    %v97 = vld [vmem:[#allocation3] sm:$0xf]
    %v98 = vld [vmem:[#allocation8] sm:$0xff]
    %v99 = vld [vmem:[#allocation8 + $0x8] sm:$0xff]
    %v100 = vld [vmem:[#allocation8 + $0x10] sm:$0xff]
    %v101 = vld [vmem:[#allocation8 + $0x18] sm:$0xff]
    %v102 = vld [vmem:[#allocation8 + $0x20] sm:$0xff]
    %v103 = vld [vmem:[#allocation8 + $0x28] sm:$0xff]
    %v104 = vld [vmem:[#allocation8 + $0x30] sm:$0xff]
    %v105 = vld [vmem:[#allocation8 + $0x38] sm:$0xff]
    %v106 = vld [vmem:[#allocation8 + $0x40] sm:$0xff]
    %v107 = vld [vmem:[#allocation8 + $0x48] sm:$0xff]
    %v108 = vld [vmem:[#allocation8 + $0x50] sm:$0xff]
    %v109 = vld [vmem:[#allocation8 + $0x58] sm:$0xff]
    %v110 = vld [vmem:[#allocation8 + $0x60] sm:$0xff]
    %v111 = vld [vmem:[#allocation8 + $0x68] sm:$0xff]
    %v112 = vld [vmem:[#allocation8 + $0x70] sm:$0xff]
    %v113 = vld [vmem:[#allocation8 + $0x78] sm:$0xff]
    %v114 = vld [vmem:[#allocation8 + $0x80] sm:$0xff]
    %v115 = vld [vmem:[#allocation8 + $0x88] sm:$0xff]
    %v116 = vld [vmem:[#allocation8 + $0x90] sm:$0xff]
    %v117 = vld [vmem:[#allocation8 + $0x98] sm:$0xff]
    %v118 = vld [vmem:[#allocation8 + $0xa0] sm:$0xff]
    %v119 = vld [vmem:[#allocation8 + $0xa8] sm:$0xff]
    %v120 = vld [vmem:[#allocation8 + $0xb0] sm:$0xff]
    %v121 = vld [vmem:[#allocation8 + $0xb8] sm:$0xff]
    %v122 = vld [vmem:[#allocation8 + $0xc0] sm:$0xff]
    %v123 = vld [vmem:[#allocation8 + $0xc8] sm:$0xff]
    %v124 = vld [vmem:[#allocation8 + $0xd0] sm:$0xff]
    %v125 = vld [vmem:[#allocation8 + $0xd8] sm:$0xff]
    %v126 = vld [vmem:[#allocation8 + $0xe0] sm:$0xff]
    %v127 = vld [vmem:[#allocation8 + $0xe8] sm:$0xff]
    %v128 = vld [vmem:[#allocation8 + $0xf0] sm:$0xff]
    %v129 = vld [vmem:[#allocation8 + $0xf8] sm:$0xff]
    %v130 = vld [vmem:[#allocation8 + $0x100] sm:$0xff]
    %v131 = vld [vmem:[#allocation8 + $0x108] sm:$0xff]
    %v132 = vld [vmem:[#allocation8 + $0x110] sm:$0xff]
    %v133 = vld [vmem:[#allocation8 + $0x118] sm:$0xff]
    %v134 = vld [vmem:[#allocation8 + $0x120] sm:$0xff]
    %v135 = vld [vmem:[#allocation8 + $0x128] sm:$0xff]
    %v136 = vld [vmem:[#allocation8 + $0x130] sm:$0xff]
    %v137 = vld [vmem:[#allocation8 + $0x138] sm:$0xff]
    %v138 = vld [vmem:[#allocation8 + $0x140] sm:$0xff]
    %v139 = vld [vmem:[#allocation8 + $0x148] sm:$0xff]
    %v140 = vld [vmem:[#allocation8 + $0x150] sm:$0xff]
    %v141 = vld [vmem:[#allocation8 + $0x158] sm:$0xff]
    %v142 = vld [vmem:[#allocation8 + $0x160] sm:$0xff]
    %v143 = vld [vmem:[#allocation8 + $0x168] sm:$0xff]
    %v144 = vld [vmem:[#allocation8 + $0x170] sm:$0xff]
    %v145 = vld [vmem:[#allocation8 + $0x178] sm:$0xff]
    %v194 = vunpack.c.l.b16 %v98
    %v195 = vunpack.c.h.b16 %v98
    %v196 = vunpack.c.l.b16 %v99
    %v197 = vunpack.c.h.b16 %v99
    %v198 = vunpack.c.l.b16 %v100
    %v199 = vunpack.c.h.b16 %v100
    %v200 = vunpack.c.l.b16 %v101
    %v201 = vunpack.c.h.b16 %v101
    %v202 = vunpack.c.l.b16 %v102
    %v203 = vunpack.c.h.b16 %v102
    %v204 = vunpack.c.l.b16 %v103
    %v205 = vunpack.c.h.b16 %v103
    %v206 = vunpack.c.l.b16 %v104
    %v207 = vunpack.c.h.b16 %v104
    %v208 = vunpack.c.l.b16 %v105
    %v209 = vunpack.c.h.b16 %v105
    %v210 = vunpack.c.l.b16 %v106
    %v211 = vunpack.c.h.b16 %v106
    %v212 = vunpack.c.l.b16 %v107
    %v213 = vunpack.c.h.b16 %v107
    %v214 = vunpack.c.l.b16 %v108
    %v215 = vunpack.c.h.b16 %v108
    %v216 = vunpack.c.l.b16 %v109
    %v217 = vunpack.c.h.b16 %v109
    %v218 = vunpack.c.l.b16 %v110
    %v219 = vunpack.c.h.b16 %v110
    %v220 = vunpack.c.l.b16 %v111
    %v221 = vunpack.c.h.b16 %v111
    %v222 = vunpack.c.l.b16 %v112
    %v223 = vunpack.c.h.b16 %v112
    %v224 = vunpack.c.l.b16 %v113
    %v225 = vunpack.c.h.b16 %v113
    %v226 = vunpack.c.l.b16 %v114
    %v227 = vunpack.c.h.b16 %v114
    %v228 = vunpack.c.l.b16 %v115
    %v229 = vunpack.c.h.b16 %v115
    %v230 = vunpack.c.l.b16 %v116
    %v231 = vunpack.c.h.b16 %v116
    %v232 = vunpack.c.l.b16 %v117
    %v233 = vunpack.c.h.b16 %v117
    %v234 = vunpack.c.l.b16 %v118
    %v235 = vunpack.c.h.b16 %v118
    %v236 = vunpack.c.l.b16 %v119
    %v237 = vunpack.c.h.b16 %v119
    %v238 = vunpack.c.l.b16 %v120
    %v239 = vunpack.c.h.b16 %v120
    %v240 = vunpack.c.l.b16 %v121
    %v241 = vunpack.c.h.b16 %v121
    %v242 = vunpack.c.l.b16 %v122
    %v243 = vunpack.c.h.b16 %v122
    %v244 = vunpack.c.l.b16 %v123
    %v245 = vunpack.c.h.b16 %v123
    %v246 = vunpack.c.l.b16 %v124
    %v247 = vunpack.c.h.b16 %v124
    %v248 = vunpack.c.l.b16 %v125
    %v249 = vunpack.c.h.b16 %v125
    %v250 = vunpack.c.l.b16 %v126
    %v251 = vunpack.c.h.b16 %v126
    %v252 = vunpack.c.l.b16 %v127
    %v253 = vunpack.c.h.b16 %v127
    %v254 = vunpack.c.l.b16 %v128
    %v255 = vunpack.c.h.b16 %v128
    %v256 = vunpack.c.l.b16 %v129
    %v257 = vunpack.c.h.b16 %v129
    %v258 = vunpack.c.l.b16 %v130
    %v259 = vunpack.c.h.b16 %v130
    %v260 = vunpack.c.l.b16 %v131
    %v261 = vunpack.c.h.b16 %v131
    %v262 = vunpack.c.l.b16 %v132
    %v263 = vunpack.c.h.b16 %v132
    %v264 = vunpack.c.l.b16 %v133
    %v265 = vunpack.c.h.b16 %v133
    %v266 = vunpack.c.l.b16 %v134
    %v267 = vunpack.c.h.b16 %v134
    %v268 = vunpack.c.l.b16 %v135
    %v269 = vunpack.c.h.b16 %v135
    %v270 = vunpack.c.l.b16 %v136
    %v271 = vunpack.c.h.b16 %v136
    %v272 = vunpack.c.l.b16 %v137
    %v273 = vunpack.c.h.b16 %v137
    %v274 = vunpack.c.l.b16 %v138
    %v275 = vunpack.c.h.b16 %v138
    %v276 = vunpack.c.l.b16 %v139
    %v277 = vunpack.c.h.b16 %v139
    %v278 = vunpack.c.l.b16 %v140
    %v279 = vunpack.c.h.b16 %v140
    %v280 = vunpack.c.l.b16 %v141
    %v281 = vunpack.c.h.b16 %v141
    %v282 = vunpack.c.l.b16 %v142
    %v283 = vunpack.c.h.b16 %v142
    %v284 = vunpack.c.l.b16 %v143
    %v285 = vunpack.c.h.b16 %v143
    %v286 = vunpack.c.l.b16 %v144
    %v287 = vunpack.c.h.b16 %v144
    %v288 = vunpack.c.l.b16 %v145
    %v289 = vunpack.c.h.b16 %v145
    %v290 = vpack.c.b16 %v200, %v194
    %v291 = vpack.c.b16 %v201, %v195
    %v292 = vpack.c.b16 %v202, %v196
    %v293 = vpack.c.b16 %v203, %v197
    %v294 = vpack.c.b16 %v204, %v198
    %v295 = vpack.c.b16 %v205, %v199
    %v296 = vpack.c.b16 %v212, %v206
    %v297 = vpack.c.b16 %v213, %v207
    %v298 = vpack.c.b16 %v214, %v208
    %v299 = vpack.c.b16 %v215, %v209
    %v300 = vpack.c.b16 %v216, %v210
    %v301 = vpack.c.b16 %v217, %v211
    %v302 = vpack.c.b16 %v224, %v218
    %v303 = vpack.c.b16 %v225, %v219
    %v304 = vpack.c.b16 %v226, %v220
    %v305 = vpack.c.b16 %v227, %v221
    %v306 = vpack.c.b16 %v228, %v222
    %v307 = vpack.c.b16 %v229, %v223
    %v308 = vpack.c.b16 %v236, %v230
    %v309 = vpack.c.b16 %v237, %v231
    %v310 = vpack.c.b16 %v238, %v232
    %v311 = vpack.c.b16 %v239, %v233
    %v312 = vpack.c.b16 %v240, %v234
    %v313 = vpack.c.b16 %v241, %v235
    %v314 = vpack.c.b16 %v248, %v242
    %v315 = vpack.c.b16 %v249, %v243
    %v316 = vpack.c.b16 %v250, %v244
    %v317 = vpack.c.b16 %v251, %v245
    %v318 = vpack.c.b16 %v252, %v246
    %v319 = vpack.c.b16 %v253, %v247
    %v320 = vpack.c.b16 %v260, %v254
    %v321 = vpack.c.b16 %v261, %v255
    %v322 = vpack.c.b16 %v262, %v256
    %v323 = vpack.c.b16 %v263, %v257
    %v324 = vpack.c.b16 %v264, %v258
    %v325 = vpack.c.b16 %v265, %v259
    %v326 = vpack.c.b16 %v272, %v266
    %v327 = vpack.c.b16 %v273, %v267
    %v328 = vpack.c.b16 %v274, %v268
    %v329 = vpack.c.b16 %v275, %v269
    %v330 = vpack.c.b16 %v276, %v270
    %v331 = vpack.c.b16 %v277, %v271
    %v332 = vpack.c.b16 %v284, %v278
    %v333 = vpack.c.b16 %v285, %v279
    %v334 = vpack.c.b16 %v286, %v280
    %v335 = vpack.c.b16 %v287, %v281
    %v336 = vpack.c.b16 %v288, %v282
    %v337 = vpack.c.b16 %v289, %v283
    %386 = vmatpush.bf16.msra.mxu0 %v332
    %387 = vmatpush.bf16.msra.mxu0 %v326
    %388 = vmatpush.bf16.msra.mxu0 %v320
    %389 = vmatpush.bf16.msra.mxu0 %v314
    %390 = vmatpush.bf16.msra.mxu0 %v308
    %391 = vmatpush.bf16.msra.mxu0 %v302
    %392 = vmatpush.bf16.msra.mxu0 %v296
    %393 = vmatpush.bf16.msra.mxu0 %v290
    %394 = vmatmul.bf16.gmra.mxu0 %v97
    %v395 = vpop.f32.mrf.mxu0
    %v396 = vadd.f32 0.0, %v395
    %v397 = vpop.f32.mrf.mxu0
    %398 = vdwg.mxu0
    %399 = vmatpush.bf16.msra.mxu0 %v333
    %400 = vmatpush.bf16.msra.mxu0 %v327
    %401 = vmatpush.bf16.msra.mxu0 %v321
    %402 = vmatpush.bf16.msra.mxu0 %v315
    %403 = vmatpush.bf16.msra.mxu0 %v309
    %404 = vmatpush.bf16.msra.mxu0 %v303
    %405 = vmatpush.bf16.msra.mxu0 %v297
    %406 = vmatpush.bf16.msra.mxu0 %v291
    %407 = vmatmul.bf16.gmra.mxu0 %v97
    %v408 = vpop.f32.mrf.mxu0
    %v409 = vadd.f32 0.0, %v408
    %v410 = vpop.f32.mrf.mxu0
    %411 = vdwg.mxu0
    %412 = vmatpush.bf16.msra.mxu0 %v334
    %413 = vmatpush.bf16.msra.mxu0 %v328
    %414 = vmatpush.bf16.msra.mxu0 %v322
    %415 = vmatpush.bf16.msra.mxu0 %v316
    %416 = vmatpush.bf16.msra.mxu0 %v310
    %417 = vmatpush.bf16.msra.mxu0 %v304
    %418 = vmatpush.bf16.msra.mxu0 %v298
    %419 = vmatpush.bf16.msra.mxu0 %v292
    %420 = vmatmul.bf16.gmra.mxu0 %v97
    %v421 = vpop.f32.mrf.mxu0
    %v422 = vadd.f32 0.0, %v421
    %v423 = vpop.f32.mrf.mxu0
    %424 = vdwg.mxu0
    %425 = vmatpush.bf16.msra.mxu0 %v335
    %426 = vmatpush.bf16.msra.mxu0 %v329
    %427 = vmatpush.bf16.msra.mxu0 %v323
    %428 = vmatpush.bf16.msra.mxu0 %v317
    %429 = vmatpush.bf16.msra.mxu0 %v311
    %430 = vmatpush.bf16.msra.mxu0 %v305
    %431 = vmatpush.bf16.msra.mxu0 %v299
    %432 = vmatpush.bf16.msra.mxu0 %v293
    %433 = vmatmul.bf16.gmra.mxu0 %v97
    %v434 = vpop.f32.mrf.mxu0
    %v435 = vadd.f32 0.0, %v434
    %v436 = vpop.f32.mrf.mxu0
    %437 = vdwg.mxu0
    %438 = vmatpush.bf16.msra.mxu0 %v336
    %439 = vmatpush.bf16.msra.mxu0 %v330
    %440 = vmatpush.bf16.msra.mxu0 %v324
    %441 = vmatpush.bf16.msra.mxu0 %v318
    %442 = vmatpush.bf16.msra.mxu0 %v312
    %443 = vmatpush.bf16.msra.mxu0 %v306
    %444 = vmatpush.bf16.msra.mxu0 %v300
    %445 = vmatpush.bf16.msra.mxu0 %v294
    %446 = vmatmul.bf16.gmra.mxu0 %v97
    %v447 = vpop.f32.mrf.mxu0
    %v448 = vadd.f32 0.0, %v447
    %v449 = vpop.f32.mrf.mxu0
    %450 = vdwg.mxu0
    %451 = vmatpush.bf16.msra.mxu0 %v337
    %452 = vmatpush.bf16.msra.mxu0 %v331
    %453 = vmatpush.bf16.msra.mxu0 %v325
    %454 = vmatpush.bf16.msra.mxu0 %v319
    %455 = vmatpush.bf16.msra.mxu0 %v313
    %456 = vmatpush.bf16.msra.mxu0 %v307
    %457 = vmatpush.bf16.msra.mxu0 %v301
    %458 = vmatpush.bf16.msra.mxu0 %v295
    %459 = vmatmul.bf16.gmra.mxu0 %v97
    %v460 = vpop.f32.mrf.mxu0
    %v461 = vadd.f32 0.0, %v460
    %v462 = vpop.f32.mrf.mxu0
    %463 = vdwg.mxu0
    %v464 = vld [vmem:[#allocation11] sm:$0x3f]
    %v465 = vld [vmem:[#allocation6] sm:$0xf]
    %v466 = vld [vmem:[#allocation9] sm:$0xff]
    %v467 = vld [vmem:[#allocation9 + $0x8] sm:$0xff]
    %v468 = vld [vmem:[#allocation9 + $0x10] sm:$0xff]
    %v469 = vld [vmem:[#allocation9 + $0x18] sm:$0xff]
    %v470 = vld [vmem:[#allocation9 + $0x20] sm:$0xff]
    %v471 = vld [vmem:[#allocation9 + $0x28] sm:$0xff]
    %v472 = vld [vmem:[#allocation9 + $0x30] sm:$0xff]
    %v473 = vld [vmem:[#allocation9 + $0x38] sm:$0xff]
    %v474 = vld [vmem:[#allocation9 + $0x40] sm:$0xff]
    %v475 = vld [vmem:[#allocation9 + $0x48] sm:$0xff]
    %v476 = vld [vmem:[#allocation9 + $0x50] sm:$0xff]
    %v477 = vld [vmem:[#allocation9 + $0x58] sm:$0xff]
    %v478 = vld [vmem:[#allocation9 + $0x60] sm:$0xff]
    %v479 = vld [vmem:[#allocation9 + $0x68] sm:$0xff]
    %v480 = vld [vmem:[#allocation9 + $0x70] sm:$0xff]
    %v481 = vld [vmem:[#allocation9 + $0x78] sm:$0xff]
    %v482 = vld [vmem:[#allocation9 + $0x80] sm:$0xff]
    %v483 = vld [vmem:[#allocation9 + $0x88] sm:$0xff]
    %v484 = vld [vmem:[#allocation9 + $0x90] sm:$0xff]
    %v485 = vld [vmem:[#allocation9 + $0x98] sm:$0xff]
    %v486 = vld [vmem:[#allocation9 + $0xa0] sm:$0xff]
    %v487 = vld [vmem:[#allocation9 + $0xa8] sm:$0xff]
    %v488 = vld [vmem:[#allocation9 + $0xb0] sm:$0xff]
    %v489 = vld [vmem:[#allocation9 + $0xb8] sm:$0xff]
    %v490 = vld [vmem:[#allocation9 + $0xc0] sm:$0xff]
    %v491 = vld [vmem:[#allocation9 + $0xc8] sm:$0xff]
    %v492 = vld [vmem:[#allocation9 + $0xd0] sm:$0xff]
    %v493 = vld [vmem:[#allocation9 + $0xd8] sm:$0xff]
    %v494 = vld [vmem:[#allocation9 + $0xe0] sm:$0xff]
    %v495 = vld [vmem:[#allocation9 + $0xe8] sm:$0xff]
    %v496 = vld [vmem:[#allocation9 + $0xf0] sm:$0xff]
    %v497 = vld [vmem:[#allocation9 + $0xf8] sm:$0xff]
    %v498 = vld [vmem:[#allocation9 + $0x100] sm:$0xff]
    %v499 = vld [vmem:[#allocation9 + $0x108] sm:$0xff]
    %v500 = vld [vmem:[#allocation9 + $0x110] sm:$0xff]
    %v501 = vld [vmem:[#allocation9 + $0x118] sm:$0xff]
    %v502 = vld [vmem:[#allocation9 + $0x120] sm:$0xff]
    %v503 = vld [vmem:[#allocation9 + $0x128] sm:$0xff]
    %v504 = vld [vmem:[#allocation9 + $0x130] sm:$0xff]
    %v505 = vld [vmem:[#allocation9 + $0x138] sm:$0xff]
    %v506 = vld [vmem:[#allocation9 + $0x140] sm:$0xff]
    %v507 = vld [vmem:[#allocation9 + $0x148] sm:$0xff]
    %v508 = vld [vmem:[#allocation9 + $0x150] sm:$0xff]
    %v509 = vld [vmem:[#allocation9 + $0x158] sm:$0xff]
    %v510 = vld [vmem:[#allocation9 + $0x160] sm:$0xff]
    %v511 = vld [vmem:[#allocation9 + $0x168] sm:$0xff]
    %v512 = vld [vmem:[#allocation9 + $0x170] sm:$0xff]
    %v513 = vld [vmem:[#allocation9 + $0x178] sm:$0xff]
    %v562 = vunpack.c.l.b16 %v466
    %v563 = vunpack.c.h.b16 %v466
    %v564 = vunpack.c.l.b16 %v467
    %v565 = vunpack.c.h.b16 %v467
    %v566 = vunpack.c.l.b16 %v468
    %v567 = vunpack.c.h.b16 %v468
    %v568 = vunpack.c.l.b16 %v469
    %v569 = vunpack.c.h.b16 %v469
    %v570 = vunpack.c.l.b16 %v470
    %v571 = vunpack.c.h.b16 %v470
    %v572 = vunpack.c.l.b16 %v471
    %v573 = vunpack.c.h.b16 %v471
    %v574 = vunpack.c.l.b16 %v472
    %v575 = vunpack.c.h.b16 %v472
    %v576 = vunpack.c.l.b16 %v473
    %v577 = vunpack.c.h.b16 %v473
    %v578 = vunpack.c.l.b16 %v474
    %v579 = vunpack.c.h.b16 %v474
    %v580 = vunpack.c.l.b16 %v475
    %v581 = vunpack.c.h.b16 %v475
    %v582 = vunpack.c.l.b16 %v476
    %v583 = vunpack.c.h.b16 %v476
    %v584 = vunpack.c.l.b16 %v477
    %v585 = vunpack.c.h.b16 %v477
    %v586 = vunpack.c.l.b16 %v478
    %v587 = vunpack.c.h.b16 %v478
    %v588 = vunpack.c.l.b16 %v479
    %v589 = vunpack.c.h.b16 %v479
    %v590 = vunpack.c.l.b16 %v480
    %v591 = vunpack.c.h.b16 %v480
    %v592 = vunpack.c.l.b16 %v481
    %v593 = vunpack.c.h.b16 %v481
    %v594 = vunpack.c.l.b16 %v482
    %v595 = vunpack.c.h.b16 %v482
    %v596 = vunpack.c.l.b16 %v483
    %v597 = vunpack.c.h.b16 %v483
    %v598 = vunpack.c.l.b16 %v484
    %v599 = vunpack.c.h.b16 %v484
    %v600 = vunpack.c.l.b16 %v485
    %v601 = vunpack.c.h.b16 %v485
    %v602 = vunpack.c.l.b16 %v486
    %v603 = vunpack.c.h.b16 %v486
    %v604 = vunpack.c.l.b16 %v487
    %v605 = vunpack.c.h.b16 %v487
    %v606 = vunpack.c.l.b16 %v488
    %v607 = vunpack.c.h.b16 %v488
    %v608 = vunpack.c.l.b16 %v489
    %v609 = vunpack.c.h.b16 %v489
    %v610 = vunpack.c.l.b16 %v490
    %v611 = vunpack.c.h.b16 %v490
    %v612 = vunpack.c.l.b16 %v491
    %v613 = vunpack.c.h.b16 %v491
    %v614 = vunpack.c.l.b16 %v492
    %v615 = vunpack.c.h.b16 %v492
    %v616 = vunpack.c.l.b16 %v493
    %v617 = vunpack.c.h.b16 %v493
    %v618 = vunpack.c.l.b16 %v494
    %v619 = vunpack.c.h.b16 %v494
    %v620 = vunpack.c.l.b16 %v495
    %v621 = vunpack.c.h.b16 %v495
    %v622 = vunpack.c.l.b16 %v496
    %v623 = vunpack.c.h.b16 %v496
    %v624 = vunpack.c.l.b16 %v497
    %v625 = vunpack.c.h.b16 %v497
    %v626 = vunpack.c.l.b16 %v498
    %v627 = vunpack.c.h.b16 %v498
    %v628 = vunpack.c.l.b16 %v499
    %v629 = vunpack.c.h.b16 %v499
    %v630 = vunpack.c.l.b16 %v500
    %v631 = vunpack.c.h.b16 %v500
    %v632 = vunpack.c.l.b16 %v501
    %v633 = vunpack.c.h.b16 %v501
    %v634 = vunpack.c.l.b16 %v502
    %v635 = vunpack.c.h.b16 %v502
    %v636 = vunpack.c.l.b16 %v503
    %v637 = vunpack.c.h.b16 %v503
    %v638 = vunpack.c.l.b16 %v504
    %v639 = vunpack.c.h.b16 %v504
    %v640 = vunpack.c.l.b16 %v505
    %v641 = vunpack.c.h.b16 %v505
    %v642 = vunpack.c.l.b16 %v506
    %v643 = vunpack.c.h.b16 %v506
    %v644 = vunpack.c.l.b16 %v507
    %v645 = vunpack.c.h.b16 %v507
    %v646 = vunpack.c.l.b16 %v508
    %v647 = vunpack.c.h.b16 %v508
    %v648 = vunpack.c.l.b16 %v509
    %v649 = vunpack.c.h.b16 %v509
    %v650 = vunpack.c.l.b16 %v510
    %v651 = vunpack.c.h.b16 %v510
    %v652 = vunpack.c.l.b16 %v511
    %v653 = vunpack.c.h.b16 %v511
    %v654 = vunpack.c.l.b16 %v512
    %v655 = vunpack.c.h.b16 %v512
    %v656 = vunpack.c.l.b16 %v513
    %v657 = vunpack.c.h.b16 %v513
    %v658 = vpack.c.b16 %v568, %v562
    %v659 = vpack.c.b16 %v569, %v563
    %v660 = vpack.c.b16 %v570, %v564
    %v661 = vpack.c.b16 %v571, %v565
    %v662 = vpack.c.b16 %v572, %v566
    %v663 = vpack.c.b16 %v573, %v567
    %v664 = vpack.c.b16 %v580, %v574
    %v665 = vpack.c.b16 %v581, %v575
    %v666 = vpack.c.b16 %v582, %v576
    %v667 = vpack.c.b16 %v583, %v577
    %v668 = vpack.c.b16 %v584, %v578
    %v669 = vpack.c.b16 %v585, %v579
    %v670 = vpack.c.b16 %v592, %v586
    %v671 = vpack.c.b16 %v593, %v587
    %v672 = vpack.c.b16 %v594, %v588
    %v673 = vpack.c.b16 %v595, %v589
    %v674 = vpack.c.b16 %v596, %v590
    %v675 = vpack.c.b16 %v597, %v591
    %v676 = vpack.c.b16 %v604, %v598
    %v677 = vpack.c.b16 %v605, %v599
    %v678 = vpack.c.b16 %v606, %v600
    %v679 = vpack.c.b16 %v607, %v601
    %v680 = vpack.c.b16 %v608, %v602
    %v681 = vpack.c.b16 %v609, %v603
    %v682 = vpack.c.b16 %v616, %v610
    %v683 = vpack.c.b16 %v617, %v611
    %v684 = vpack.c.b16 %v618, %v612
    %v685 = vpack.c.b16 %v619, %v613
    %v686 = vpack.c.b16 %v620, %v614
    %v687 = vpack.c.b16 %v621, %v615
    %v688 = vpack.c.b16 %v628, %v622
    %v689 = vpack.c.b16 %v629, %v623
    %v690 = vpack.c.b16 %v630, %v624
    %v691 = vpack.c.b16 %v631, %v625
    %v692 = vpack.c.b16 %v632, %v626
    %v693 = vpack.c.b16 %v633, %v627
    %v694 = vpack.c.b16 %v640, %v634
    %v695 = vpack.c.b16 %v641, %v635
    %v696 = vpack.c.b16 %v642, %v636
    %v697 = vpack.c.b16 %v643, %v637
    %v698 = vpack.c.b16 %v644, %v638
    %v699 = vpack.c.b16 %v645, %v639
    %v700 = vpack.c.b16 %v652, %v646
    %v701 = vpack.c.b16 %v653, %v647
    %v702 = vpack.c.b16 %v654, %v648
    %v703 = vpack.c.b16 %v655, %v649
    %v704 = vpack.c.b16 %v656, %v650
    %v705 = vpack.c.b16 %v657, %v651
    %754 = vmatpush.bf16.msra.mxu0 %v700
    %755 = vmatpush.bf16.msra.mxu0 %v694
    %756 = vmatpush.bf16.msra.mxu0 %v688
    %757 = vmatpush.bf16.msra.mxu0 %v682
    %758 = vmatpush.bf16.msra.mxu0 %v676
    %759 = vmatpush.bf16.msra.mxu0 %v670
    %760 = vmatpush.bf16.msra.mxu0 %v664
    %761 = vmatpush.bf16.msra.mxu0 %v658
    %762 = vmatmul.bf16.gmra.mxu0 %v465
    %v763 = vpop.f32.mrf.mxu0
    %v764 = vadd.f32 0.0, %v763
    %v765 = vpop.f32.mrf.mxu0
    %766 = vdwg.mxu0
    %767 = vmatpush.bf16.msra.mxu0 %v701
    %768 = vmatpush.bf16.msra.mxu0 %v695
    %769 = vmatpush.bf16.msra.mxu0 %v689
    %770 = vmatpush.bf16.msra.mxu0 %v683
    %771 = vmatpush.bf16.msra.mxu0 %v677
    %772 = vmatpush.bf16.msra.mxu0 %v671
    %773 = vmatpush.bf16.msra.mxu0 %v665
    %774 = vmatpush.bf16.msra.mxu0 %v659
    %775 = vmatmul.bf16.gmra.mxu0 %v465
    %v776 = vpop.f32.mrf.mxu0
    %v777 = vadd.f32 0.0, %v776
    %v778 = vpop.f32.mrf.mxu0
    %779 = vdwg.mxu0
    %780 = vmatpush.bf16.msra.mxu0 %v702
    %781 = vmatpush.bf16.msra.mxu0 %v696
    %782 = vmatpush.bf16.msra.mxu0 %v690
    %783 = vmatpush.bf16.msra.mxu0 %v684
    %784 = vmatpush.bf16.msra.mxu0 %v678
    %785 = vmatpush.bf16.msra.mxu0 %v672
    %786 = vmatpush.bf16.msra.mxu0 %v666
    %787 = vmatpush.bf16.msra.mxu0 %v660
    %788 = vmatmul.bf16.gmra.mxu0 %v465
    %v789 = vpop.f32.mrf.mxu0
    %v790 = vadd.f32 0.0, %v789
    %v791 = vpop.f32.mrf.mxu0
    %792 = vdwg.mxu0
    %793 = vmatpush.bf16.msra.mxu0 %v703
    %794 = vmatpush.bf16.msra.mxu0 %v697
    %795 = vmatpush.bf16.msra.mxu0 %v691
    %796 = vmatpush.bf16.msra.mxu0 %v685
    %797 = vmatpush.bf16.msra.mxu0 %v679
    %798 = vmatpush.bf16.msra.mxu0 %v673
    %799 = vmatpush.bf16.msra.mxu0 %v667
    %800 = vmatpush.bf16.msra.mxu0 %v661
    %801 = vmatmul.bf16.gmra.mxu0 %v465
    %v802 = vpop.f32.mrf.mxu0
    %v803 = vadd.f32 0.0, %v802
    %v804 = vpop.f32.mrf.mxu0
    %805 = vdwg.mxu0
    %806 = vmatpush.bf16.msra.mxu0 %v704
    %807 = vmatpush.bf16.msra.mxu0 %v698
    %808 = vmatpush.bf16.msra.mxu0 %v692
    %809 = vmatpush.bf16.msra.mxu0 %v686
    %810 = vmatpush.bf16.msra.mxu0 %v680
    %811 = vmatpush.bf16.msra.mxu0 %v674
    %812 = vmatpush.bf16.msra.mxu0 %v668
    %813 = vmatpush.bf16.msra.mxu0 %v662
    %814 = vmatmul.bf16.gmra.mxu0 %v465
    %v815 = vpop.f32.mrf.mxu0
    %v816 = vadd.f32 0.0, %v815
    %v817 = vpop.f32.mrf.mxu0
    %818 = vdwg.mxu0
    %819 = vmatpush.bf16.msra.mxu0 %v705
    %820 = vmatpush.bf16.msra.mxu0 %v699
    %821 = vmatpush.bf16.msra.mxu0 %v693
    %822 = vmatpush.bf16.msra.mxu0 %v687
    %823 = vmatpush.bf16.msra.mxu0 %v681
    %824 = vmatpush.bf16.msra.mxu0 %v675
    %825 = vmatpush.bf16.msra.mxu0 %v669
    %826 = vmatpush.bf16.msra.mxu0 %v663
    %827 = vmatmul.bf16.gmra.mxu0 %v465
    %v828 = vpop.f32.mrf.mxu0
    %v829 = vadd.f32 0.0, %v828
    %v830 = vpop.f32.mrf.mxu0
    %831 = vdwg.mxu0
    %v838 = vrot.slane %v409, 7
    %v839 = vrot.slane %v422, 6
    %v840 = vrot.slane %v435, 5
    %v841 = vrot.slane %v448, 4
    %v842 = vrot.slane %v461, 3
    %vm843 = vcmask 1040384
    %v844 = vsel %vm843, %v396, %v838
    %vm845 = vcmask 1041408
    %v846 = vsel %vm845, %v844, %v839
    %vm847 = vcmask 1043459
    %v848 = vsel %vm847, %v840, %v841
    %vm849 = vcmask 1044483
    %v850 = vsel %vm849, %v848, %v842
    %vm851 = vcmask 1042432
    %v852 = vsel %vm851, %v846, %v850
    %vm853 = vcmask 1041409
    %v854 = vsel %vm853, %v396, %v838
    %vm855 = vcmask 1042433
    %v856 = vsel %vm855, %v854, %v839
    %vm857 = vcmask 1044484
    %v858 = vsel %vm857, %v840, %v841
    %vm859 = vcmask 1045508
    %v860 = vsel %vm859, %v858, %v842
    %vm861 = vcmask 1043457
    %v862 = vsel %vm861, %v856, %v860
    %v863 = vrot.slane %v862, 1
    %vm864 = vcmask 1042434
    %v865 = vsel %vm864, %v396, %v838
    %vm866 = vcmask 1043458
    %v867 = vsel %vm866, %v865, %v839
    %vm868 = vcmask 1045509
    %v869 = vsel %vm868, %v840, %v841
    %vm870 = vcmask 1046533
    %v871 = vsel %vm870, %v869, %v842
    %vm872 = vcmask 1044482
    %v873 = vsel %vm872, %v867, %v871
    %v874 = vrot.slane %v873, 2
    %v875 = vsel %vm847, %v396, %v838
    %v876 = vsel %vm849, %v875, %v839
    %vm877 = vcmask 1046534
    %v878 = vsel %vm877, %v840, %v841
    %vm879 = vcmask 1045504
    %v880 = vsel %vm879, %v842, %v878
    %vm881 = vcmask 1045507
    %v882 = vsel %vm881, %v876, %v880
    %v883 = vrot.slane %v882, 3
    %v884 = vsel %vm857, %v396, %v838
    %v885 = vsel %vm859, %v884, %v839
    %vm886 = vcmask 1046528
    %v887 = vsel %vm886, %v841, %v840
    %vm888 = vcmask 1046529
    %v889 = vsel %vm888, %v842, %v887
    %vm890 = vcmask 1046532
    %v891 = vsel %vm890, %v885, %v889
    %v892 = vrot.slane %v891, 4
    %v893 = vsel %vm868, %v396, %v838
    %v894 = vsel %vm870, %v893, %v839
    %v895 = vsel %vm843, %v840, %v841
    %v896 = vsel %vm845, %v895, %v842
    %vm897 = vcmask 1044480
    %v898 = vsel %vm897, %v896, %v894
    %v899 = vrot.slane %v898, 5
    %v900 = vsel %vm877, %v396, %v838
    %v901 = vsel %vm879, %v839, %v900
    %v902 = vsel %vm853, %v840, %v841
    %v903 = vsel %vm855, %v902, %v842
    %vm904 = vcmask 1045505
    %v905 = vsel %vm904, %v903, %v901
    %v906 = vrot.slane %v905, 6
    %v907 = vsel %vm886, %v838, %v396
    %v908 = vsel %vm888, %v839, %v907
    %v909 = vsel %vm864, %v840, %v841
    %v910 = vsel %vm866, %v909, %v842
    %vm911 = vcmask 1046530
    %v912 = vsel %vm911, %v910, %v908
    %v913 = vrot.slane %v912, 7
    %v914 = vperm.slane %v852, 0
    %v915 = vperm.slane %v852, 1
    %v916 = vperm.slane %v852, 2
    %v917 = vperm.slane %v852, 3
    %v918 = vperm.slane %v852, 4
    %v919 = vperm.slane %v852, 5
    %v920 = vperm.slane %v863, 0
    %v921 = vperm.slane %v863, 1
    %v922 = vperm.slane %v863, 2
    %v923 = vperm.slane %v863, 3
    %v924 = vperm.slane %v863, 4
    %v925 = vperm.slane %v863, 5
    %v926 = vperm.slane %v874, 0
    %v927 = vperm.slane %v874, 1
    %v928 = vperm.slane %v874, 2
    %v929 = vperm.slane %v874, 3
    %v930 = vperm.slane %v874, 4
    %v931 = vperm.slane %v874, 5
    %v932 = vperm.slane %v883, 0
    %v933 = vperm.slane %v883, 1
    %v934 = vperm.slane %v883, 2
    %v935 = vperm.slane %v883, 3
    %v936 = vperm.slane %v883, 4
    %v937 = vperm.slane %v883, 5
    %v938 = vperm.slane %v892, 0
    %v939 = vperm.slane %v892, 1
    %v940 = vperm.slane %v892, 2
    %v941 = vperm.slane %v892, 3
    %v942 = vperm.slane %v892, 4
    %v943 = vperm.slane %v892, 5
    %v944 = vperm.slane %v899, 0
    %v945 = vperm.slane %v899, 1
    %v946 = vperm.slane %v899, 2
    %v947 = vperm.slane %v899, 3
    %v948 = vperm.slane %v899, 4
    %v949 = vperm.slane %v899, 5
    %v950 = vperm.slane %v906, 0
    %v951 = vperm.slane %v906, 1
    %v952 = vperm.slane %v906, 2
    %v953 = vperm.slane %v906, 3
    %v954 = vperm.slane %v906, 4
    %v955 = vperm.slane %v906, 5
    %v956 = vperm.slane %v913, 0
    %v957 = vperm.slane %v913, 1
    %v958 = vperm.slane %v913, 2
    %v959 = vperm.slane %v913, 3
    %v960 = vperm.slane %v913, 4
    %v961 = vperm.slane %v913, 5
    %v1010 = vadd.f32 %v914, %v764
    %v1011 = vadd.f32 %v915, %v777
    %v1012 = vadd.f32 %v916, %v790
    %v1013 = vadd.f32 %v917, %v803
    %v1014 = vadd.f32 %v918, %v816
    %v1015 = vadd.f32 %v919, %v829
    %v1016 = vadd.f32 %v920, %v764
    %v1017 = vadd.f32 %v921, %v777
    %v1018 = vadd.f32 %v922, %v790
    %v1019 = vadd.f32 %v923, %v803
    %v1020 = vadd.f32 %v924, %v816
    %v1021 = vadd.f32 %v925, %v829
    %v1022 = vadd.f32 %v926, %v764
    %v1023 = vadd.f32 %v927, %v777
    %v1024 = vadd.f32 %v928, %v790
    %v1025 = vadd.f32 %v929, %v803
    %v1026 = vadd.f32 %v930, %v816
    %v1027 = vadd.f32 %v931, %v829
    %v1028 = vadd.f32 %v932, %v764
    %v1029 = vadd.f32 %v933, %v777
    %v1030 = vadd.f32 %v934, %v790
    %v1031 = vadd.f32 %v935, %v803
    %v1032 = vadd.f32 %v936, %v816
    %v1033 = vadd.f32 %v937, %v829
    %v1034 = vadd.f32 %v938, %v764
    %v1035 = vadd.f32 %v939, %v777
    %v1036 = vadd.f32 %v940, %v790
    %v1037 = vadd.f32 %v941, %v803
    %v1038 = vadd.f32 %v942, %v816
    %v1039 = vadd.f32 %v943, %v829
    %v1040 = vadd.f32 %v944, %v764
    %v1041 = vadd.f32 %v945, %v777
    %v1042 = vadd.f32 %v946, %v790
    %v1043 = vadd.f32 %v947, %v803
    %v1044 = vadd.f32 %v948, %v816
    %v1045 = vadd.f32 %v949, %v829
    %v1046 = vadd.f32 %v950, %v764
    %v1047 = vadd.f32 %v951, %v777
    %v1048 = vadd.f32 %v952, %v790
    %v1049 = vadd.f32 %v953, %v803
    %v1050 = vadd.f32 %v954, %v816
    %v1051 = vadd.f32 %v955, %v829
    %v1052 = vadd.f32 %v956, %v764
    %v1053 = vadd.f32 %v957, %v777
    %v1054 = vadd.f32 %v958, %v790
    %v1055 = vadd.f32 %v959, %v803
    %v1056 = vadd.f32 %v960, %v816
    %v1057 = vadd.f32 %v961, %v829
    %v1058 = vtanh.pop %v1010
    %v1059 = vtanh.pop %v1011
    %v1060 = vtanh.pop %v1012
    %v1061 = vtanh.pop %v1013
    %v1062 = vtanh.pop %v1014
    %v1063 = vtanh.pop %v1015
    %v1064 = vtanh.pop %v1016
    %v1065 = vtanh.pop %v1017
    %v1066 = vtanh.pop %v1018
    %v1067 = vtanh.pop %v1019
    %v1068 = vtanh.pop %v1020
    %v1069 = vtanh.pop %v1021
    %v1070 = vtanh.pop %v1022
    %v1071 = vtanh.pop %v1023
    %v1072 = vtanh.pop %v1024
    %v1073 = vtanh.pop %v1025
    %v1074 = vtanh.pop %v1026
    %v1075 = vtanh.pop %v1027
    %v1076 = vtanh.pop %v1028
    %v1077 = vtanh.pop %v1029
    %v1078 = vtanh.pop %v1030
    %v1079 = vtanh.pop %v1031
    %v1080 = vtanh.pop %v1032
    %v1081 = vtanh.pop %v1033
    %v1082 = vtanh.pop %v1034
    %v1083 = vtanh.pop %v1035
    %v1084 = vtanh.pop %v1036
    %v1085 = vtanh.pop %v1037
    %v1086 = vtanh.pop %v1038
    %v1087 = vtanh.pop %v1039
    %v1088 = vtanh.pop %v1040
    %v1089 = vtanh.pop %v1041
    %v1090 = vtanh.pop %v1042
    %v1091 = vtanh.pop %v1043
    %v1092 = vtanh.pop %v1044
    %v1093 = vtanh.pop %v1045
    %v1094 = vtanh.pop %v1046
    %v1095 = vtanh.pop %v1047
    %v1096 = vtanh.pop %v1048
    %v1097 = vtanh.pop %v1049
    %v1098 = vtanh.pop %v1050
    %v1099 = vtanh.pop %v1051
    %v1100 = vtanh.pop %v1052
    %v1101 = vtanh.pop %v1053
    %v1102 = vtanh.pop %v1054
    %v1103 = vtanh.pop %v1055
    %v1104 = vtanh.pop %v1056
    %v1105 = vtanh.pop %v1057
    %v1107 = vperm.slane %v464, 0
    %v1108 = vperm.slane %v464, 1
    %v1109 = vperm.slane %v464, 2
    %v1110 = vperm.slane %v464, 3
    %v1111 = vperm.slane %v464, 4
    %v1112 = vperm.slane %v464, 5
    %v1119 = vmul.f32 %v1058, %v1107
    %v1120 = vmul.f32 %v1059, %v1108
    %v1121 = vmul.f32 %v1060, %v1109
    %v1122 = vmul.f32 %v1061, %v1110
    %v1123 = vmul.f32 %v1062, %v1111
    %v1124 = vmul.f32 %v1063, %v1112
    %v1125 = vmul.f32 %v1064, %v1107
    %v1126 = vmul.f32 %v1065, %v1108
    %v1127 = vmul.f32 %v1066, %v1109
    %v1128 = vmul.f32 %v1067, %v1110
    %v1129 = vmul.f32 %v1068, %v1111
    %v1130 = vmul.f32 %v1069, %v1112
    %v1131 = vmul.f32 %v1070, %v1107
    %v1132 = vmul.f32 %v1071, %v1108
    %v1133 = vmul.f32 %v1072, %v1109
    %v1134 = vmul.f32 %v1073, %v1110
    %v1135 = vmul.f32 %v1074, %v1111
    %v1136 = vmul.f32 %v1075, %v1112
    %v1137 = vmul.f32 %v1076, %v1107
    %v1138 = vmul.f32 %v1077, %v1108
    %v1139 = vmul.f32 %v1078, %v1109
    %v1140 = vmul.f32 %v1079, %v1110
    %v1141 = vmul.f32 %v1080, %v1111
    %v1142 = vmul.f32 %v1081, %v1112
    %v1143 = vmul.f32 %v1082, %v1107
    %v1144 = vmul.f32 %v1083, %v1108
    %v1145 = vmul.f32 %v1084, %v1109
    %v1146 = vmul.f32 %v1085, %v1110
    %v1147 = vmul.f32 %v1086, %v1111
    %v1148 = vmul.f32 %v1087, %v1112
    %v1149 = vmul.f32 %v1088, %v1107
    %v1150 = vmul.f32 %v1089, %v1108
    %v1151 = vmul.f32 %v1090, %v1109
    %v1152 = vmul.f32 %v1091, %v1110
    %v1153 = vmul.f32 %v1092, %v1111
    %v1154 = vmul.f32 %v1093, %v1112
    %v1155 = vmul.f32 %v1094, %v1107
    %v1156 = vmul.f32 %v1095, %v1108
    %v1157 = vmul.f32 %v1096, %v1109
    %v1158 = vmul.f32 %v1097, %v1110
    %v1159 = vmul.f32 %v1098, %v1111
    %v1160 = vmul.f32 %v1099, %v1112
    %v1161 = vmul.f32 %v1100, %v1107
    %v1162 = vmul.f32 %v1101, %v1108
    %v1163 = vmul.f32 %v1102, %v1109
    %v1164 = vmul.f32 %v1103, %v1110
    %v1165 = vmul.f32 %v1104, %v1111
    %v1166 = vmul.f32 %v1105, %v1112
    %v1167 = vadd.f32 %v1119, %v1120
    %v1168 = vadd.f32 %v1167, %v1121
    %v1169 = vadd.f32 %v1168, %v1122
    %v1170 = vadd.f32 %v1169, %v1123
    %v1171 = vadd.f32 %v1170, %v1124
    %1172 = vadd.xlane.f32.xlu0 %v1171
    %v1173 = vpop.xlane.xlu0 %1172
    %v1174 = vadd.f32 %v1125, %v1126
    %v1175 = vadd.f32 %v1174, %v1127
    %v1176 = vadd.f32 %v1175, %v1128
    %v1177 = vadd.f32 %v1176, %v1129
    %v1178 = vadd.f32 %v1177, %v1130
    %1179 = vadd.xlane.f32.xlu0 %v1178
    %v1180 = vpop.xlane.xlu0 %1179
    %v1181 = vadd.f32 %v1131, %v1132
    %v1182 = vadd.f32 %v1181, %v1133
    %v1183 = vadd.f32 %v1182, %v1134
    %v1184 = vadd.f32 %v1183, %v1135
    %v1185 = vadd.f32 %v1184, %v1136
    %1186 = vadd.xlane.f32.xlu0 %v1185
    %v1187 = vpop.xlane.xlu0 %1186
    %v1188 = vadd.f32 %v1137, %v1138
    %v1189 = vadd.f32 %v1188, %v1139
    %v1190 = vadd.f32 %v1189, %v1140
    %v1191 = vadd.f32 %v1190, %v1141
    %v1192 = vadd.f32 %v1191, %v1142
    %1193 = vadd.xlane.f32.xlu0 %v1192
    %v1194 = vpop.xlane.xlu0 %1193
    %v1195 = vadd.f32 %v1143, %v1144
    %v1196 = vadd.f32 %v1195, %v1145
    %v1197 = vadd.f32 %v1196, %v1146
    %v1198 = vadd.f32 %v1197, %v1147
    %v1199 = vadd.f32 %v1198, %v1148
    %1200 = vadd.xlane.f32.xlu0 %v1199
    %v1201 = vpop.xlane.xlu0 %1200
    %v1202 = vadd.f32 %v1149, %v1150
    %v1203 = vadd.f32 %v1202, %v1151
    %v1204 = vadd.f32 %v1203, %v1152
    %v1205 = vadd.f32 %v1204, %v1153
    %v1206 = vadd.f32 %v1205, %v1154
    %1207 = vadd.xlane.f32.xlu0 %v1206
    %v1208 = vpop.xlane.xlu0 %1207
    %v1209 = vadd.f32 %v1155, %v1156
    %v1210 = vadd.f32 %v1209, %v1157
    %v1211 = vadd.f32 %v1210, %v1158
    %v1212 = vadd.f32 %v1211, %v1159
    %v1213 = vadd.f32 %v1212, %v1160
    %1214 = vadd.xlane.f32.xlu0 %v1213
    %v1215 = vpop.xlane.xlu0 %1214
    %v1216 = vadd.f32 %v1161, %v1162
    %v1217 = vadd.f32 %v1216, %v1163
    %v1218 = vadd.f32 %v1217, %v1164
    %v1219 = vadd.f32 %v1218, %v1165
    %v1220 = vadd.f32 %v1219, %v1166
    %1221 = vadd.xlane.f32.xlu0 %v1220
    %v1222 = vpop.xlane.xlu0 %1221
    %v1231 = vlaneseq
    %v1232 = vand.u32 %v1231, 127
    %v1233 = vperm.slane %v1173, %v1232
    %v1234 = vperm.slane %v1180, %v1232
    %v1235 = vperm.slane %v1187, %v1232
    %v1236 = vperm.slane %v1194, %v1232
    %v1237 = vperm.slane %v1201, %v1232
    %v1238 = vperm.slane %v1208, %v1232
    %v1239 = vperm.slane %v1215, %v1232
    %v1240 = vperm.slane %v1222, %v1232
    %v1241 = vsel %vm853, %v1234, %v1233
    %v1242 = vsel %vm864, %v1235, %v1241
    %v1243 = vsel %vm847, %v1236, %v1242
    %v1244 = vsel %vm857, %v1237, %v1243
    %v1245 = vsel %vm868, %v1238, %v1244
    %v1246 = vsel %vm877, %v1239, %v1245
    %vm1247 = vcmask 1047559
    %v1248 = vsel %vm1247, %v1240, %v1246
    %vm1250 = vcmask 64512
    %1251 = vst.msk [vmem:[#allocation2] sm:$0xff] %vm1250, %v1248
    %v1252 = vld [vmem:[#allocation2] sm:$0xff]
    %v1253 = vsel %vm1250, %v1252, -inf
    %1254 = vmax.xlane.f32.xlu0 %v1253
    %v1255 = vpop.xlane.xlu0 %1254
    %v1256 = vsub.f32 %v1252, %v1255
    %v1257 = vmul.f32 %v1256, 1.442695
    %v1258 = vpow.pop %v1257
    %v1259 = vsel %vm1250, %v1258, 0.0
    %1260 = vadd.xlane.f32.xlu0 %v1259
    %v1261 = vpop.xlane.xlu0 %1260
    %v1262 = vrcp.pop %v1261
    %v1263 = vmul.f32 %v1258, %v1262
    %v1264 = vld [vmem:[%s2] sm:$0x1]
    %v1266 = vperm.slane %v1264, 0
    %v1268 = vmul.f32 %v1263, %v1266
    %v1269 = vpack.c.bf16 %v1268, %v1268
    %v1270 = vld [vmem:[#allocation6] sm:$0xf]
    %v1272 = vsel %vm1250, %v1269, 0
    %vm1274 = vcmask 1043456
    %v1276 = vsel %vm1274, %v1270, 0
    %1278 = vmatpush.bf16.msra.mxu0 0
    %1279 = vmatpush.bf16.msra.mxu0 0
    %1280 = vmatpush.bf16.msra.mxu0 0
    %1281 = vmatpush.bf16.msra.mxu0 0
    %1282 = vmatpush.bf16.msra.mxu0 0
    %1283 = vmatpush.bf16.msra.mxu0 0
    %1284 = vmatpush.bf16.msra.mxu0 0
    %1285 = vmatpush.bf16.msra.mxu0 %v1276
    %1286 = vmatmul.bf16.gmra.mxu0 %v1272
    %v1287 = vpop.f32.mrf.mxu0
    %v1288 = vadd.f32 0.0, %v1287
    %v1289 = vpop.f32.mrf.mxu0
    %1290 = vdwg.mxu0
    %1291 = vst [vmem:[#allocation12] sm:$0xff] %v1288
    // Predicated region
    $region46: #{tpu_custom_call.1} parent=1 // pred_check
      _
    $region47: #{tpu_custom_call.1} parent=1 // pred_check_branch
      %1293 = sbr.rel (0) target = $region49
    $region48: #{tpu_custom_call.1} parent=1 // pred_region
      %1295 = vsyncadd [#allocation5], 0
      %s1297 = sshll.u32 [#allocation12], 4
      %s1298 = int_to_ptr.vmem [resolvable:$true] %s1297
      %s1299 = sshll.u32 %s6, 4
      %s1300 = int_to_ptr.hbm [resolvable:$true] %s1299
      %1302 = dma.vmem_to_hbm [thread:$0]  %s1298, 128, %s1300, [#allocation5]
    $region49: #{tpu_custom_call.1} parent=1 // pred_fallthru
      _
    // Predicated region
    $region50: #{tpu_custom_call.1} parent=1 // pred_check
      _
    $region51: #{tpu_custom_call.1} parent=1 // pred_check_branch
      %1304 = sbr.rel (0) target = $region53
    $region52: #{tpu_custom_call.1} parent=1 // pred_region
      %1306 = dma.done [#allocation5], 128
    $region53: #{tpu_custom_call.1} parent=1 // pred_fallthru
      _
    %1307 = vsyncpa [#allocation4], 1
    %1308 = vsyncpa [#allocation7], 1
    %1309 = vsyncpa [#allocation10], 1
    %1310 = vsyncpa [#allocation5], 1

</llo_original>
